<compile_context>
chip_gen: v6e
topology: v6e:2x2x1
jax: 0.10.0
libtpu: 0.0.40
codegen_flags: <defaults>
</compile_context>

<pallas_src>
import jax
import jax.numpy as jnp
from jax.experimental import pallas as pl
from jax.experimental.pallas import tpu as pltpu


def _round_up(x, m):
    return (x + m - 1) // m * m


def _vmem_capacity_bytes():
    """Physical per-core VMEM; conservative 64 MiB (v7x) if the query fails."""
    try:
        cap = getattr(pltpu.get_tpu_info(), "vmem_capacity_bytes", None)
        if cap and int(cap) >= (32 << 20):
            return int(cap)
    except Exception:
        pass
    return 64 << 20


def _pick_spatial_tile(hw, rows_in_pad, rows_out_pad, itemsize, budget_bytes,
                       min_tiles=1):
    """Largest 128-multiple lane tile whose double-buffered in+out tiles fit
    the VMEM budget, balanced so there is no tiny ragged last tile."""
    per_lane = 2 * (rows_in_pad + rows_out_pad) * itemsize   # 2x-buffered in + out
    usable = max(budget_bytes - (4 << 20), 2 << 20)          # weights/compiler slack
    ts_budget = max((usable // per_lane) // 128 * 128, 128)
    n_tiles = max(pl.cdiv(hw, ts_budget), min_tiles)
    if n_tiles <= 1:
        return hw, 1                                         # full extent is legal
    ts = min(128 * pl.cdiv(hw, 128 * n_tiles), ts_budget)    # balanced 128-multiple
    return ts, pl.cdiv(hw, ts)


def _outconv_flat_kernel(x_ref, w_ref, b_ref, o_ref):
    # x_ref: (R_in, TS)   w_ref: (R_out, R_in)   b_ref: (R_out, 1)
    # o_ref: (R_out, TS)
    acc = jnp.dot(w_ref[...], x_ref[...],
                  preferred_element_type=jnp.float32)        # (R_out, TS)
    o_ref[...] = (acc + b_ref[...].astype(jnp.float32)).astype(o_ref.dtype)


def _outconv_batched_kernel(x_ref, w_ref, b_ref, o_ref):
    # x_ref: (1, C_in, TS)  w_ref: (C_out, C_in)  b_ref: (C_out, 1)
    # o_ref: (1, C_out, TS)
    acc = jnp.dot(w_ref[...], x_ref[0],
                  preferred_element_type=jnp.float32)        # (C_out, TS)
    o_ref[0] = (acc + b_ref[...].astype(jnp.float32)).astype(o_ref.dtype)


def outconv_pallas(x_nchw, weight, bias):
    """1x1 Conv2d forward.

    x_nchw : (N, C_in, H, W)
    weight : (C_out, C_in, 1, 1) or (C_out, C_in)
    bias   : (C_out,)
    returns: (N, C_out, H, W)
    """
    N, C_in, H, W = x_nchw.shape
    C_out = weight.shape[0]
    HW = H * W
    dtype = x_nchw.dtype
    itemsize = jnp.dtype(dtype).itemsize
    pack = max(8, 32 // itemsize)                            # sublane pack (8/16/32)

    # Per-generation VMEM budget: ~48 MiB on v7x (64 MiB phys), ~96 MiB on
    # v5e/v6e (128 MiB phys).  Also used as the explicit scoped-VMEM limit.
    cap = _vmem_capacity_bytes()
    budget = max(min((cap * 3) // 4, cap - (16 << 20)), 32 << 20)
    # v7x megacore occupancy: keep >= 2 grid steps once HW is big enough that
    # the fixed per-step overhead is well amortized.
    min_tiles = 2 if HW >= (1 << 14) else 1

    w2d = weight.reshape(C_out, C_in).astype(dtype)          # (C_out, C_in)

    # --- Path 1: batch-folded 2D (block-diagonal weight) ---------------------
    if N * C_in <= 256 and N * C_out <= 256:
        R_in, R_out = N * C_in, N * C_out
        R_in_pad = _round_up(R_in, pack)
        R_out_pad = _round_up(R_out, pack)
        ts, n_tiles = _pick_spatial_tile(HW, R_in_pad, R_out_pad, itemsize,
                                         budget, min_tiles)

        x2d = x_nchw.reshape(R_in, HW)                       # free reshape
        w_bd = jnp.kron(jnp.eye(N, dtype=w2d.dtype), w2d)    # (R_out, R_in)
        b2d = jnp.tile(bias.astype(dtype), N).reshape(R_out, 1)

        out2d = pl.pallas_call(
            _outconv_flat_kernel,
            out_shape=jax.ShapeDtypeStruct((R_out, HW), dtype),
            grid_spec=pltpu.PrefetchScalarGridSpec(
                num_scalar_prefetch=0,
                grid=(n_tiles,),
                in_specs=[
                    pl.BlockSpec((R_in, ts), lambda s: (0, s)),
                    pl.BlockSpec((R_out, R_in), lambda s: (0, 0)),
                    pl.BlockSpec((R_out, 1), lambda s: (0, 0)),
                ],
                out_specs=pl.BlockSpec((R_out, ts), lambda s: (0, s)),
            ),
            compiler_params=pltpu.CompilerParams(
                dimension_semantics=("parallel",),
                vmem_limit_bytes=int(budget)),
        )(x2d, w_bd, b2d)
        return out2d.reshape(N, C_out, H, W)                 # free reshape

    # --- Path 2: fallback, one image per grid step ---------------------------
    C_in_pad = _round_up(C_in, pack)
    C_out_pad = _round_up(C_out, pack)
    ts, n_tiles = _pick_spatial_tile(HW, C_in_pad, C_out_pad, itemsize,
                                     budget, min_tiles)

    x3d = x_nchw.reshape(N, C_in, HW)
    b2d = bias.astype(dtype).reshape(C_out, 1)

    out3d = pl.pallas_call(
        _outconv_batched_kernel,
        out_shape=jax.ShapeDtypeStruct((N, C_out, HW), dtype),
        grid_spec=pltpu.PrefetchScalarGridSpec(
            num_scalar_prefetch=0,
            grid=(N, n_tiles),
            in_specs=[
                pl.BlockSpec((1, C_in, ts), lambda n, s: (n, 0, s)),
                pl.BlockSpec((C_out, C_in), lambda n, s: (0, 0)),
                pl.BlockSpec((C_out, 1), lambda n, s: (0, 0)),
            ],
            out_specs=pl.BlockSpec((1, C_out, ts), lambda n, s: (n, 0, s)),
        ),
        compiler_params=pltpu.CompilerParams(
            dimension_semantics=("parallel", "parallel"),
            vmem_limit_bytes=int(budget)),
    )(x3d, w2d, b2d)
    return out3d.reshape(N, C_out, H, W)


def _reference(x_nchw, weight, bias):
    # lax conv as ground truth for the 1x1 conv
    w4d = weight.reshape(weight.shape[0], x_nchw.shape[1], 1, 1)
    y = jax.lax.conv_general_dilated(
        x_nchw, w4d, window_strides=(1, 1), padding="VALID",
        dimension_numbers=("NCHW", "OIHW", "NCHW"))
    return y + bias.reshape(1, -1, 1, 1)


if __name__ == "__main__":
    key = jax.random.PRNGKey(0)
    k_x, k_w, k_b = jax.random.split(key, 3)

    N, C_in, C_out, H, W = 2, 4, 3, 16, 16

    x = jax.random.normal(k_x, (N, C_in, H, W), dtype=jnp.float32)

    # Deterministic parameter init mimicking nn.Conv2d defaults
    # (uniform in +/- 1/sqrt(fan_in) with fan_in = C_in * 1 * 1).
    bound = 1.0 / jnp.sqrt(jnp.float32(C_in))
    weight = jax.random.uniform(k_w, (C_out, C_in, 1, 1),
                                minval=-bound, maxval=bound,
                                dtype=jnp.float32)
    bias = jax.random.uniform(k_b, (C_out,),
                              minval=-bound, maxval=bound,
                              dtype=jnp.float32)

    y = jax.block_until_ready(outconv_pallas(x, weight, bias))

    y_ref = _reference(x, weight, bias)
    assert y.shape == (N, C_out, H, W)
    assert jnp.allclose(y, y_ref, atol=1e-5, rtol=1e-5)

    print("KERNEL_OK")
</pallas_src>

<mosaic_0001>
module attributes {stable_mosaic.version = 11 : i64} {
  func.func @_outconv_flat_kernel(%arg0: i32, %arg1: memref<8x256xf32, #tpu.memory_space<vmem>>, %arg2: memref<6x8xf32, #tpu.memory_space<vmem>>, %arg3: memref<6x1xf32, #tpu.memory_space<vmem>>, %arg4: memref<6x256xf32, #tpu.memory_space<vmem>>) attributes {dimension_semantics = [#tpu.dimension_semantics<parallel>], iteration_bounds = array<i64: 1>, scalar_prefetch = 0 : i64, scratch_operands = 0 : i64, tpu.core_type = #tpu.core_type<tc>, window_params = [{transform_indices = @transform_0, window_bounds = array<i64: 8, 256>}, {pipeline_mode = #tpu.pipeline_mode<synchronous>, transform_indices = @transform_1, window_bounds = array<i64: 6, 8>}, {pipeline_mode = #tpu.pipeline_mode<synchronous>, transform_indices = @transform_2, window_bounds = array<i64: 6, 1>}, {transform_indices = @transform_3, window_bounds = array<i64: 6, 256>}]} {
    %c0 = arith.constant 0 : index
    %c0_0 = arith.constant 0 : index
    %0 = vector.load %arg2[%c0, %c0_0] : memref<6x8xf32, #tpu.memory_space<vmem>>, vector<6x8xf32>
    %c0_1 = arith.constant 0 : index
    %c0_2 = arith.constant 0 : index
    %1 = vector.load %arg1[%c0_1, %c0_2] : memref<8x256xf32, #tpu.memory_space<vmem>>, vector<8x256xf32>
    %cst = arith.constant dense<0.000000e+00> : vector<6x256xf32>
    %2 = tpu.matmul %0, %1, %cst {dimension_numbers = #tpu.dot_dimension_numbers<[1], [0], [0], [1], [0, 0, 1, 1], [], []>} : vector<6x8xf32>, vector<8x256xf32>, vector<6x256xf32> -> vector<6x256xf32>
    %c0_3 = arith.constant 0 : index
    %c0_4 = arith.constant 0 : index
    %3 = vector.load %arg3[%c0_3, %c0_4] : memref<6x1xf32, #tpu.memory_space<vmem>>, vector<6x1xf32>
    %4 = vector.broadcast %3 : vector<6x1xf32> to vector<6x256xf32>
    %5 = arith.addf %2, %4 : vector<6x256xf32>
    %c0_5 = arith.constant 0 : index
    %c0_6 = arith.constant 0 : index
    %6 = vector.load %arg4[%c0_5, %c0_6] : memref<6x256xf32, #tpu.memory_space<vmem>>, vector<6x256xf32>
    tpu.vector_store %arg4[%c0_5, %c0_6], %5 {strides = array<i32>} : memref<6x256xf32, #tpu.memory_space<vmem>>, vector<6x256xf32>,
    return
  }
  func.func @transform_0(%arg0: i32) -> (i32, i32) {
    %c0_i32 = arith.constant 0 : i32
    %c0_i32_0 = arith.constant 0 : i32
    return %c0_i32, %arg0 : i32, i32
  }
  func.func @transform_1(%arg0: i32) -> (i32, i32) {
    %c0_i32 = arith.constant 0 : i32
    %c0_i32_0 = arith.constant 0 : i32
    %c0_i32_1 = arith.constant 0 : i32
    return %c0_i32, %c0_i32_0 : i32, i32
  }
  func.func @transform_2(%arg0: i32) -> (i32, i32) {
    %c0_i32 = arith.constant 0 : i32
    %c0_i32_0 = arith.constant 0 : i32
    %c0_i32_1 = arith.constant 0 : i32
    return %c0_i32, %c0_i32_0 : i32, i32
  }
  func.func @transform_3(%arg0: i32) -> (i32, i32) {
    %c0_i32 = arith.constant 0 : i32
    %c0_i32_0 = arith.constant 0 : i32
    return %c0_i32, %arg0 : i32, i32
  }
}

</mosaic_0001>

<llo_original>
// kernel: tpu_custom_call.1
$region0: #{tpu_custom_call.1}
  #allocation0 [shape = 'u32[]', space=smem, size = 0x4, offset = 0x4, fixed_abs, tag = 'smem constant byte address 0x4 - core index']
  #allocation1 [shape = 'u32[144,128]{1,0:T(1,128)}', space=vmem, size = 0x12000, scoped, tag = 'internal scratch']
  %s0 = inlined_call_operand.hbm [shape: f32[8,256], index: 0, kind: input, shape index: {}]
  %s1 = inlined_call_operand.vmem [shape: f32[6,8], index: 1, kind: input, shape index: {}]
  %s2 = inlined_call_operand.vmem [shape: f32[6,1], index: 2, kind: input, shape index: {}]
  %s3 = inlined_call_operand.hbm [shape: f32[6,256], index: 3, kind: output, shape index: {}]
  %s4 = sld [smem:[#allocation0]]
  $region26: #{tpu_custom_call.1} parent=0
    _
  %s6 = ssub.s32 1, %s4
  %s7 = scalar_select 0, %s6, %s4
  $region1: #{tpu_custom_call.1} parent=0
    #allocation2 [shape = 'u8[8192]{0}', space=vmem, size = 0x2000, scoped, tag = 'input window, operand 0, single buffered']
    #allocation3 [shape = 's32[1]{0}', space=sflag, size = 0x4, scoped, tag = 'scoped memory for tpu_custom_call.1']
    #allocation4 [shape = 's32[1]{0}', space=sflag, size = 0x4, scoped, tag = 'scoped memory for tpu_custom_call.1']
    #allocation5 [shape = 'u8[8192]{0}', space=vmem, size = 0x2000, scoped, tag = 'output window, operand 0, single buffered']
    %8 = vsyncpa [#allocation3], 0
    %9 = vsyncpa [#allocation4], 0
    // Predicated region
    $region2: #{tpu_custom_call.1} parent=1 // pred_check
      _
    $region3: #{tpu_custom_call.1} parent=1 // pred_check_branch
      %11 = sbr.rel (0) target = $region5
    $region4: #{tpu_custom_call.1} parent=1 // pred_region
      %s13 = ssub.s32 256, 256
      %14 = vsyncadd [#allocation3], %s13
      %s16 = sshll.u32 [#allocation2], 4
      %s17 = int_to_ptr.vmem [resolvable:$true] %s16
      %19 = dma.hbm_to_vmem [thread:$0]  %s0, 256, %s17, [#allocation3]
    $region5: #{tpu_custom_call.1} parent=1 // pred_fallthru
      _
    // Predicated region
    $region6: #{tpu_custom_call.1} parent=1 // pred_check
      _
    $region7: #{tpu_custom_call.1} parent=1 // pred_check_branch
      %21 = sbr.rel (0) target = $region9
    $region8: #{tpu_custom_call.1} parent=1 // pred_region
      _
    $region9: #{tpu_custom_call.1} parent=1 // pred_fallthru
      _
    // Predicated region
    $region10: #{tpu_custom_call.1} parent=1 // pred_check
      _
    $region11: #{tpu_custom_call.1} parent=1 // pred_check_branch
      %23 = sbr.rel (0) target = $region13
    $region12: #{tpu_custom_call.1} parent=1 // pred_region
      _
    $region13: #{tpu_custom_call.1} parent=1 // pred_fallthru
      _
    // Predicated region
    $region14: #{tpu_custom_call.1} parent=1 // pred_check
      _
    $region15: #{tpu_custom_call.1} parent=1 // pred_check_branch
      %25 = sbr.rel (0) target = $region17
    $region16: #{tpu_custom_call.1} parent=1 // pred_region
      %26 = dma.done [#allocation3], 256
    $region17: #{tpu_custom_call.1} parent=1 // pred_fallthru
      _
    %v27 = vld [vmem:[%s1] sm:$0x3f]
    %v28 = vld [vmem:[#allocation2] sm:$0xff]
    %v29 = vld [vmem:[#allocation2 + $0x8] sm:$0xff]
    %v30 = vld [vmem:[%s2] sm:$0x3f]
    %32 = vset.pattern.permute.xlu0 0
    %33 = vperm.xlu0 %32, %v30
    %v34 = vpop.permute.xlu0 %33
    %vm36 = vcmask 64512
    %v38 = vsel %vm36, %v27, 0
    %40 = vmatprep.subr.mxu0 0.0
    %41 = vmatpush1.msra.mxu0 0.0
    %42 = vmatprep.subr.mxu0 0.0
    %43 = vmatpush1.msra.mxu0 0.0
    %44 = vmatprep.subr.mxu0 0.0
    %45 = vmatpush1.msra.mxu0 0.0
    %46 = vmatprep.subr.mxu0 0.0
    %47 = vmatpush1.msra.mxu0 0.0
    %48 = vmatprep.subr.mxu0 0.0
    %49 = vmatpush1.msra.mxu0 0.0
    %50 = vmatprep.subr.mxu0 0.0
    %51 = vmatpush1.msra.mxu0 0.0
    %52 = vmatprep.subr.mxu0 0.0
    %53 = vmatpush1.msra.mxu0 0.0
    %54 = vmatprep.subr.mxu0 0.0
    %55 = vmatpush1.msra.mxu0 0.0
    %56 = vmatprep.subr.mxu0 0.0
    %57 = vmatpush1.msra.mxu0 0.0
    %58 = vmatprep.subr.mxu0 0.0
    %59 = vmatpush1.msra.mxu0 0.0
    %60 = vmatprep.subr.mxu0 0.0
    %61 = vmatpush1.msra.mxu0 0.0
    %62 = vmatprep.subr.mxu0 0.0
    %63 = vmatpush1.msra.mxu0 0.0
    %64 = vmatprep.subr.mxu0 0.0
    %65 = vmatpush1.msra.mxu0 0.0
    %66 = vmatprep.subr.mxu0 0.0
    %67 = vmatpush1.msra.mxu0 0.0
    %68 = vmatprep.subr.mxu0 0.0
    %69 = vmatpush1.msra.mxu0 0.0
    %70 = vmatprep.subr.mxu0 %v29
    %71 = vmatpush1.msra.mxu0 %v28
    %72 = vmatprep.subr.mxu0 0.0
    %73 = vmatpush2.msra.mxu0 0.0
    %74 = vmatprep.subr.mxu0 0.0
    %75 = vmatpush2.msra.mxu0 0.0
    %76 = vmatprep.subr.mxu0 0.0
    %77 = vmatpush2.msra.mxu0 0.0
    %78 = vmatprep.subr.mxu0 0.0
    %79 = vmatpush2.msra.mxu0 0.0
    %80 = vmatprep.subr.mxu0 0.0
    %81 = vmatpush2.msra.mxu0 0.0
    %82 = vmatprep.subr.mxu0 0.0
    %83 = vmatpush2.msra.mxu0 0.0
    %84 = vmatprep.subr.mxu0 0.0
    %85 = vmatpush2.msra.mxu0 0.0
    %86 = vmatprep.subr.mxu0 0.0
    %87 = vmatpush2.msra.mxu0 0.0
    %88 = vmatprep.subr.mxu0 0.0
    %89 = vmatpush2.msra.mxu0 0.0
    %90 = vmatprep.subr.mxu0 0.0
    %91 = vmatpush2.msra.mxu0 0.0
    %92 = vmatprep.subr.mxu0 0.0
    %93 = vmatpush2.msra.mxu0 0.0
    %94 = vmatprep.subr.mxu0 0.0
    %95 = vmatpush2.msra.mxu0 0.0
    %96 = vmatprep.subr.mxu0 0.0
    %97 = vmatpush2.msra.mxu0 0.0
    %98 = vmatprep.subr.mxu0 0.0
    %99 = vmatpush2.msra.mxu0 0.0
    %100 = vmatprep.subr.mxu0 0.0
    %101 = vmatpush2.msra.mxu0 0.0
    %102 = vmatprep.subr.mxu0 0.0
    %103 = vmatpush2.msra.mxu0 0.0
    %104 = vmatprep.mubr.f32.mxu0 0.0
    %105 = vmatmul.mubr.f32.gmra.mxu0 %v38
    %v106 = vpop.f32.mrf.mxu0
    %v107 = vadd.f32 %v34, %v106
    %v108 = vpop.f32.mrf.mxu0
    %v109 = vadd.f32 %v34, %v108
    %110 = vdwg.mxu0
    %111 = vst [vmem:[#allocation5] sm:$0x3f] %v107
    %112 = vst [vmem:[#allocation5 + $0x8] sm:$0x3f] %v109
    // Predicated region
    $region18: #{tpu_custom_call.1} parent=1 // pred_check
      _
    $region19: #{tpu_custom_call.1} parent=1 // pred_check_branch
      %114 = sbr.rel (0) target = $region21
    $region20: #{tpu_custom_call.1} parent=1 // pred_region
      %s116 = ssub.s32 256, 256
      %117 = vsyncadd [#allocation4], %s116
      %s119 = sshll.u32 [#allocation5], 4
      %s120 = int_to_ptr.vmem [resolvable:$true] %s119
      %122 = dma.vmem_to_hbm [thread:$0]  %s120, 256, %s3, [#allocation4]
    $region21: #{tpu_custom_call.1} parent=1 // pred_fallthru
      _
    // Predicated region
    $region22: #{tpu_custom_call.1} parent=1 // pred_check
      _
    $region23: #{tpu_custom_call.1} parent=1 // pred_check_branch
      %124 = sbr.rel (0) target = $region25
    $region24: #{tpu_custom_call.1} parent=1 // pred_region
      %125 = dma.done [#allocation4], 256
    $region25: #{tpu_custom_call.1} parent=1 // pred_fallthru
      _
    %126 = vsyncpa [#allocation3], 1
    %127 = vsyncpa [#allocation4], 1

</llo_original>
